<compile_context>
chip_gen: v7x
topology: tpu7x:2x2x1
jax: 0.10.0
libtpu: 0.0.40
codegen_flags: <defaults>
</compile_context>

<pallas_src>
import functools

import jax
import jax.numpy as jnp
from jax.experimental import pallas as pl
from jax.experimental.pallas import tpu as pltpu

HIDDEN = 256
L3_PAD = 128  # lane-padded output width for the MXU layer-3 path


def _critic_kernel(x_ref, w1_ref, b1_ref, w2_ref, b2_ref, w3_ref, b3_ref, o_ref,
                   *, l3_on_mxu):
    # Layer 1: (tm, S) @ (S, 256) on the MXU, bf16 operands, f32 accumulation.
    x = x_ref[...]
    if x.dtype != jnp.bfloat16:          # static (trace-time) check; no-op if caller
        x = x.astype(jnp.bfloat16)       # already provides bf16 activations.
    h1 = jnp.dot(x, w1_ref[...], preferred_element_type=jnp.float32)
    h1 = jnp.maximum(h1 + b1_ref[...], 0.0)          # bias + ReLU in f32 (VPU)

    # Layer 2: (tm, 256) @ (256, 256), same recipe.
    h2 = jnp.dot(h1.astype(jnp.bfloat16), w2_ref[...],
                 preferred_element_type=jnp.float32)
    h2 = jnp.maximum(h2 + b2_ref[...], 0.0)

    # Layer 3 epilogue.
    if l3_on_mxu:
        # v6e / v7x: zero-padded (256, 128) bf16 matmul on the MXU; only column 0
        # carries the real weight.  Avoids the 256-lane XLU reduce competing with
        # vmatmul pushes for the vector-extended slot.
        res = jnp.dot(h2.astype(jnp.bfloat16), w3_ref[...],
                      preferred_element_type=jnp.float32)
        out = res[:, :1] + b3_ref[0]
    else:
        # v5e: VPU multiply + lane reduce; the (slower) MXU is the bottleneck
        # there and the 3 XLUs hide the reduce for free.
        out = jnp.sum(h2 * w3_ref[...], axis=-1, keepdims=True) + b3_ref[0]

    o_ref[...] = out.astype(o_ref.dtype)


def _round_up(n, m):
    return ((n + m - 1) // m) * m


def _l3_on_mxu_default():
    """Use the MXU layer-3 path except on v5-generation chips."""
    try:
        kind = jax.devices()[0].device_kind.lower()
        return "v5" not in kind
    except Exception:  # pragma: no cover - fall back to the modern-chip path
        return True


def critic_forward(x, params, *, block_b=2048, l3_on_mxu=None):
    """x: (B, state_dim) float32 or bfloat16. params: dict of f32 w1,b1,w2,b2,w3,b3."""
    B, S = x.shape
    if l3_on_mxu is None:
        l3_on_mxu = _l3_on_mxu_default()

    # Batch tiling: multiple of 8 sublanes, capped at block_b (<=2048 keeps the
    # working set inside v5e's 16 MiB scoped-VMEM default).  Tiles are balanced
    # so that when B spans multiple tiles (large B), every grid step — and on
    # v7x both TensorCores via the "parallel" axis — gets a similar amount of work.
    B8 = _round_up(B, 8)
    n_tiles = -(-B8 // min(block_b, B8))               # ceil div
    tm = _round_up(-(-B8 // n_tiles), 8)               # balanced tile, 8-aligned
    # Ragged last tile: Pallas pads OOB reads and drops OOB writes, so no jnp.pad.

    # bf16 weights for the MXU matmuls; biases stay f32.
    w1 = params["w1"].astype(jnp.bfloat16)
    w2 = params["w2"].astype(jnp.bfloat16)
    b1 = params["b1"].reshape(1, HIDDEN).astype(jnp.float32)
    b2 = params["b2"].reshape(1, HIDDEN).astype(jnp.float32)
    b3 = params["b3"].reshape(1).astype(jnp.float32)    # scalar -> SMEM

    def const(shape):
        return pl.BlockSpec(shape, lambda i: (0,) * len(shape))

    if l3_on_mxu:
        # (256, 1) column zero-padded to (256, 128) bf16 for a lane-aligned matmul.
        w3_col = params["w3"].reshape(HIDDEN, 1).astype(jnp.bfloat16)
        w3 = jnp.pad(w3_col, ((0, 0), (0, L3_PAD - 1)))     # tiny, one-time
        w3_spec = const((HIDDEN, L3_PAD))
    else:
        w3 = params["w3"].reshape(1, HIDDEN).astype(jnp.float32)
        w3_spec = const((1, HIDDEN))

    kernel = functools.partial(_critic_kernel, l3_on_mxu=l3_on_mxu)

    out = pl.pallas_call(
        kernel,
        out_shape=jax.ShapeDtypeStruct((B, 1), jnp.float32),
        grid=(n_tiles,),
        in_specs=[
            pl.BlockSpec((tm, S), lambda i: (i, 0)),            # x: tiled on batch
            const((S, HIDDEN)),                                 # w1 (VMEM-resident)
            const((1, HIDDEN)),                                 # b1
            const((HIDDEN, HIDDEN)),                            # w2 (VMEM-resident)
            const((1, HIDDEN)),                                 # b2
            w3_spec,                                            # w3 (path-dependent)
            pl.BlockSpec(memory_space=pltpu.MemorySpace.SMEM),  # b3 scalar
        ],
        out_specs=pl.BlockSpec((tm, 1), lambda i: (i, 0)),
        compiler_params=pltpu.CompilerParams(
            dimension_semantics=("parallel",),
        ),
    )(x, w1, b1, w2, b2, w3, b3)

    return out


def init_critic_params(key, state_dim):
    """Deterministic init matching torch.nn.Linear default:
    U(-1/sqrt(fan_in), 1/sqrt(fan_in)) for both weight and bias."""
    def linear_init(k, fan_in, fan_out):
        kw, kb = jax.random.split(k)
        bound = 1.0 / jnp.sqrt(float(fan_in))
        w = jax.random.uniform(kw, (fan_in, fan_out), jnp.float32, -bound, bound)
        b = jax.random.uniform(kb, (1, fan_out), jnp.float32, -bound, bound)
        return w, b

    k1, k2, k3 = jax.random.split(key, 3)
    w1, b1 = linear_init(k1, state_dim, HIDDEN)
    w2, b2 = linear_init(k2, HIDDEN, HIDDEN)
    w3, b3 = linear_init(k3, HIDDEN, 1)
    return dict(w1=w1, b1=b1, w2=w2, b2=b2, w3=w3, b3=b3)


def critic_reference(x, params):
    """Pure-JAX f32 reference of the same forward pass."""
    h1 = jnp.maximum(x @ params["w1"] + params["b1"], 0.0)
    h2 = jnp.maximum(h1 @ params["w2"] + params["b2"], 0.0)
    return h2 @ params["w3"] + params["b3"]


if __name__ == "__main__":
    key = jax.random.PRNGKey(0)
    k_params, k_x = jax.random.split(key)

    batch, state_dim = 8, 16
    params = init_critic_params(k_params, state_dim)
    x = jax.random.normal(k_x, (batch, state_dim), jnp.float32)

    out = critic_forward(x, params)
    out = jax.block_until_ready(out)

    ref = critic_reference(x, params)
    assert out.shape == (batch, 1), out.shape
    # Tolerance loosened vs the f32 reference because matmul weights are bf16.
    assert jnp.allclose(out, ref, atol=5e-2, rtol=5e-2), (
        f"mismatch: max abs err {jnp.max(jnp.abs(out - ref))}"
    )
    print("KERNEL_OK")
</pallas_src>

<mosaic_0001>
module attributes {stable_mosaic.version = 11 : i64} {
  func.func @_critic_kernel(%arg0: i32, %arg1: memref<8x16xf32, #tpu.memory_space<vmem>>, %arg2: memref<16x256xbf16, #tpu.memory_space<vmem>>, %arg3: memref<1x256xf32, #tpu.memory_space<vmem>>, %arg4: memref<256x256xbf16, #tpu.memory_space<vmem>>, %arg5: memref<1x256xf32, #tpu.memory_space<vmem>>, %arg6: memref<256x128xbf16, #tpu.memory_space<vmem>>, %arg7: memref<1xf32, #tpu.memory_space<smem>>, %arg8: memref<8x1xf32, #tpu.memory_space<vmem>>) attributes {dimension_semantics = [#tpu.dimension_semantics<parallel>], iteration_bounds = array<i64: 1>, scalar_prefetch = 0 : i64, scratch_operands = 0 : i64, tpu.core_type = #tpu.core_type<tc>, window_params = [{transform_indices = @transform_0, window_bounds = array<i64: 8, 16>}, {pipeline_mode = #tpu.pipeline_mode<synchronous>, transform_indices = @transform_1, window_bounds = array<i64: 16, 256>}, {pipeline_mode = #tpu.pipeline_mode<synchronous>, transform_indices = @transform_2, window_bounds = array<i64: 1, 256>}, {pipeline_mode = #tpu.pipeline_mode<synchronous>, transform_indices = @transform_3, window_bounds = array<i64: 256, 256>}, {pipeline_mode = #tpu.pipeline_mode<synchronous>, transform_indices = @transform_4, window_bounds = array<i64: 1, 256>}, {pipeline_mode = #tpu.pipeline_mode<synchronous>, transform_indices = @transform_5, window_bounds = array<i64: 256, 128>}, {transform_indices = @transform_6, window_bounds = array<i64: 1>}, {transform_indices = @transform_7, window_bounds = array<i64: 8, 1>}]} {
    %c0 = arith.constant 0 : index
    %c0_0 = arith.constant 0 : index
    %0 = vector.load %arg1[%c0, %c0_0] : memref<8x16xf32, #tpu.memory_space<vmem>>, vector<8x16xf32>
    %1 = arith.truncf %0 : vector<8x16xf32> to vector<8x16xbf16>
    %c0_1 = arith.constant 0 : index
    %c0_2 = arith.constant 0 : index
    %2 = vector.load %arg2[%c0_1, %c0_2] : memref<16x256xbf16, #tpu.memory_space<vmem>>, vector<16x256xbf16>
    %cst = arith.constant dense<0.000000e+00> : vector<8x256xf32>
    %3 = tpu.matmul %1, %2, %cst {dimension_numbers = #tpu.dot_dimension_numbers<[1], [0], [0], [1], [0, 0, 1, 1], [], []>} : vector<8x16xbf16>, vector<16x256xbf16>, vector<8x256xf32> -> vector<8x256xf32>
    %c0_3 = arith.constant 0 : index
    %c0_4 = arith.constant 0 : index
    %4 = vector.load %arg3[%c0_3, %c0_4] : memref<1x256xf32, #tpu.memory_space<vmem>>, vector<1x256xf32>
    %5 = vector.broadcast %4 : vector<1x256xf32> to vector<8x256xf32>
    %6 = arith.addf %3, %5 : vector<8x256xf32>
    %cst_5 = arith.constant 0.000000e+00 : f32
    %7 = vector.broadcast %cst_5 : f32 to vector<8x256xf32>
    %8 = arith.maximumf %6, %7 : vector<8x256xf32>
    %9 = arith.truncf %8 : vector<8x256xf32> to vector<8x256xbf16>
    %c0_6 = arith.constant 0 : index
    %c0_7 = arith.constant 0 : index
    %10 = vector.load %arg4[%c0_6, %c0_7] : memref<256x256xbf16, #tpu.memory_space<vmem>>, vector<256x256xbf16>
    %cst_8 = arith.constant dense<0.000000e+00> : vector<8x256xf32>
    %11 = tpu.matmul %9, %10, %cst_8 {dimension_numbers = #tpu.dot_dimension_numbers<[1], [0], [0], [1], [0, 0, 1, 1], [], []>} : vector<8x256xbf16>, vector<256x256xbf16>, vector<8x256xf32> -> vector<8x256xf32>
    %c0_9 = arith.constant 0 : index
    %c0_10 = arith.constant 0 : index
    %12 = vector.load %arg5[%c0_9, %c0_10] : memref<1x256xf32, #tpu.memory_space<vmem>>, vector<1x256xf32>
    %13 = vector.broadcast %12 : vector<1x256xf32> to vector<8x256xf32>
    %14 = arith.addf %11, %13 : vector<8x256xf32>
    %cst_11 = arith.constant 0.000000e+00 : f32
    %15 = vector.broadcast %cst_11 : f32 to vector<8x256xf32>
    %16 = arith.maximumf %14, %15 : vector<8x256xf32>
    %17 = arith.truncf %16 : vector<8x256xf32> to vector<8x256xbf16>
    %c0_12 = arith.constant 0 : index
    %c0_13 = arith.constant 0 : index
    %18 = vector.load %arg6[%c0_12, %c0_13] : memref<256x128xbf16, #tpu.memory_space<vmem>>, vector<256x128xbf16>
    %cst_14 = arith.constant dense<0.000000e+00> : vector<8x128xf32>
    %19 = tpu.matmul %17, %18, %cst_14 {dimension_numbers = #tpu.dot_dimension_numbers<[1], [0], [0], [1], [0, 0, 1, 1], [], []>} : vector<8x256xbf16>, vector<256x128xbf16>, vector<8x128xf32> -> vector<8x128xf32>
    %20 = vector.extract_strided_slice %19 {offsets = [0, 0], sizes = [8, 1], strides = [1, 1]} : vector<8x128xf32> to vector<8x1xf32>
    %c0_15 = arith.constant 0 : index
    %21 = memref.load %arg7[%c0_15] : memref<1xf32, #tpu.memory_space<smem>>
    %22 = vector.broadcast %21 : f32 to vector<8x1xf32>
    %23 = arith.addf %20, %22 : vector<8x1xf32>
    %c0_16 = arith.constant 0 : index
    %c0_17 = arith.constant 0 : index
    %24 = vector.load %arg8[%c0_16, %c0_17] : memref<8x1xf32, #tpu.memory_space<vmem>>, vector<8x1xf32>
    tpu.vector_store %arg8[%c0_16, %c0_17], %23 {strides = array<i32>} : memref<8x1xf32, #tpu.memory_space<vmem>>, vector<8x1xf32>,
    return
  }
  func.func @transform_0(%arg0: i32) -> (i32, i32) {
    %c0_i32 = arith.constant 0 : i32
    %c0_i32_0 = arith.constant 0 : i32
    return %arg0, %c0_i32 : i32, i32
  }
  func.func @transform_1(%arg0: i32) -> (i32, i32) {
    %c0_i32 = arith.constant 0 : i32
    %c0_i32_0 = arith.constant 0 : i32
    %c0_i32_1 = arith.constant 0 : i32
    return %c0_i32, %c0_i32_0 : i32, i32
  }
  func.func @transform_2(%arg0: i32) -> (i32, i32) {
    %c0_i32 = arith.constant 0 : i32
    %c0_i32_0 = arith.constant 0 : i32
    %c0_i32_1 = arith.constant 0 : i32
    return %c0_i32, %c0_i32_0 : i32, i32
  }
  func.func @transform_3(%arg0: i32) -> (i32, i32) {
    %c0_i32 = arith.constant 0 : i32
    %c0_i32_0 = arith.constant 0 : i32
    %c0_i32_1 = arith.constant 0 : i32
    return %c0_i32, %c0_i32_0 : i32, i32
  }
  func.func @transform_4(%arg0: i32) -> (i32, i32) {
    %c0_i32 = arith.constant 0 : i32
    %c0_i32_0 = arith.constant 0 : i32
    %c0_i32_1 = arith.constant 0 : i32
    return %c0_i32, %c0_i32_0 : i32, i32
  }
  func.func @transform_5(%arg0: i32) -> (i32, i32) {
    %c0_i32 = arith.constant 0 : i32
    %c0_i32_0 = arith.constant 0 : i32
    %c0_i32_1 = arith.constant 0 : i32
    return %c0_i32, %c0_i32_0 : i32, i32
  }
  func.func @transform_6(%arg0: i32) -> i32 {
    %c0_i32 = arith.constant 0 : i32
    %c0_i32_0 = arith.constant 0 : i32
    return %c0_i32 : i32
  }
  func.func @transform_7(%arg0: i32) -> (i32, i32) {
    %c0_i32 = arith.constant 0 : i32
    %c0_i32_0 = arith.constant 0 : i32
    return %arg0, %c0_i32 : i32, i32
  }
}

</mosaic_0001>

<llo_original>
// kernel: tpu_custom_call.1
$region0: #{tpu_custom_call.1}
  #allocation0 [shape = 'u32[]', space=smem, size = 0x4, offset = 0x4, fixed_abs, tag = 'smem constant byte address 0x4 - core index']
  #allocation1 [shape = 'u32[144,128]{1,0:T(1,128)}', space=vmem, size = 0x12000, scoped, tag = 'internal scratch']
  #allocation2 [shape = 'f32[1]{0:T(128)S(6)}', space=smem, size = 0x200, scoped, tag = 'scoped memory for tpu_custom_call.1']
  %s0 = inlined_call_operand.hbm [shape: f32[8,16], index: 0, kind: input, shape index: {}]
  %s1 = inlined_call_operand.hbm [shape: bf16[16,256], index: 1, kind: input, shape index: {}]
  %s2 = inlined_call_operand.vmem [shape: f32[1,256], index: 2, kind: input, shape index: {}]
  %s3 = inlined_call_operand.hbm [shape: bf16[256,256], index: 3, kind: input, shape index: {}]
  %s4 = inlined_call_operand.vmem [shape: f32[1,256], index: 4, kind: input, shape index: {}]
  %s5 = inlined_call_operand.hbm [shape: bf16[256,128], index: 5, kind: input, shape index: {}]
  %s6 = inlined_call_operand.<no memory space> [shape: f32[1], index: 6, kind: input, shape index: {}]
  %s7 = inlined_call_operand.vmem [shape: f32[8,1], index: 7, kind: output, shape index: {}]
  %s8 = sld [smem:[#allocation0]]
  $region54: #{tpu_custom_call.1} parent=0
    _
  %s10 = ssub.s32 1, %s8
  %s11 = scalar_select 0, %s10, %s8
  %12 = sst [smem:[#allocation2]] %s6
  $region1: #{tpu_custom_call.1} parent=0
    #allocation3 [shape = 'u8[4096]{0}', space=vmem, size = 0x1000, scoped, tag = 'input window, operand 0, single buffered']
    #allocation4 [shape = 's32[1]{0}', space=sflag, size = 0x4, scoped, tag = 'scoped memory for tpu_custom_call.1']
    #allocation5 [shape = 'u8[8192]{0}', space=vmem, size = 0x2000, scoped, tag = 'input window, operand 1, single buffered']
    #allocation6 [shape = 's32[1]{0}', space=sflag, size = 0x4, scoped, tag = 'scoped memory for tpu_custom_call.1']
    #allocation7 [shape = 'u8[131072]{0}', space=vmem, size = 0x20000, scoped, tag = 'input window, operand 3, single buffered']
    #allocation8 [shape = 'u8[65536]{0}', space=vmem, size = 0x10000, scoped, tag = 'input window, operand 5, single buffered']
    #allocation9 [shape = 's32[1]{0}', space=sflag, size = 0x4, scoped, tag = 'scoped memory for tpu_custom_call.1']
    %13 = vsyncpa [#allocation4], 0
    %14 = vsyncpa [#allocation6], 0
    %15 = vsyncpa [#allocation9], 0
    // Predicated region
    $region2: #{tpu_custom_call.1} parent=1 // pred_check
      _
    $region3: #{tpu_custom_call.1} parent=1 // pred_check_branch
      %17 = sbr.rel (0) target = $region5
    $region4: #{tpu_custom_call.1} parent=1 // pred_region
      %s19 = ssub.s32 128, 128
      %20 = vsyncadd [#allocation4], %s19
      %s22 = sshll.u32 [#allocation3], 4
      %s23 = int_to_ptr.vmem [resolvable:$true] %s22
      %25 = dma.hbm_to_vmem [thread:$0]  %s0, 128, %s23, [#allocation4]
    $region5: #{tpu_custom_call.1} parent=1 // pred_fallthru
      _
    // Predicated region
    $region6: #{tpu_custom_call.1} parent=1 // pred_check
      _
    $region7: #{tpu_custom_call.1} parent=1 // pred_check_branch
      %27 = sbr.rel (0) target = $region9
    $region8: #{tpu_custom_call.1} parent=1 // pred_region
      %s29 = ssub.s32 256, 256
      %30 = vsyncadd [#allocation6], %s29
      %s31 = sshll.u32 [#allocation5], 4
      %s32 = int_to_ptr.vmem [resolvable:$true] %s31
      %37 = dma.hbm_to_vmem [thread:$0]  %s1, 256, %s32, [#allocation6], 128, 128, 8
    $region9: #{tpu_custom_call.1} parent=1 // pred_fallthru
      _
    // Predicated region
    $region10: #{tpu_custom_call.1} parent=1 // pred_check
      _
    $region11: #{tpu_custom_call.1} parent=1 // pred_check_branch
      %39 = sbr.rel (0) target = $region13
    $region12: #{tpu_custom_call.1} parent=1 // pred_region
      _
    $region13: #{tpu_custom_call.1} parent=1 // pred_fallthru
      _
    // Predicated region
    $region14: #{tpu_custom_call.1} parent=1 // pred_check
      _
    $region15: #{tpu_custom_call.1} parent=1 // pred_check_branch
      %41 = sbr.rel (0) target = $region17
    $region16: #{tpu_custom_call.1} parent=1 // pred_region
      %s43 = ssub.s32 4096, 4096
      %44 = vsyncadd [#allocation6], %s43
      %s45 = sshll.u32 [#allocation7], 4
      %s46 = int_to_ptr.vmem [resolvable:$true] %s45
      %51 = dma.hbm_to_vmem [thread:$0]  %s3, 4096, %s46, [#allocation6], 128, 128, 8
    $region17: #{tpu_custom_call.1} parent=1 // pred_fallthru
      _
    // Predicated region
    $region18: #{tpu_custom_call.1} parent=1 // pred_check
      _
    $region19: #{tpu_custom_call.1} parent=1 // pred_check_branch
      %53 = sbr.rel (0) target = $region21
    $region20: #{tpu_custom_call.1} parent=1 // pred_region
      _
    $region21: #{tpu_custom_call.1} parent=1 // pred_fallthru
      _
    // Predicated region
    $region22: #{tpu_custom_call.1} parent=1 // pred_check
      _
    $region23: #{tpu_custom_call.1} parent=1 // pred_check_branch
      %55 = sbr.rel (0) target = $region25
    $region24: #{tpu_custom_call.1} parent=1 // pred_region
      %s57 = ssub.s32 2048, 2048
      %58 = vsyncadd [#allocation9], %s57
      %s59 = sshll.u32 [#allocation8], 4
      %s60 = int_to_ptr.vmem [resolvable:$true] %s59
      %65 = dma.hbm_to_vmem [thread:$0]  %s5, 2048, %s60, [#allocation9], 64, 64, 4
    $region25: #{tpu_custom_call.1} parent=1 // pred_fallthru
      _
    // Predicated region
    $region26: #{tpu_custom_call.1} parent=1 // pred_check
      _
    $region27: #{tpu_custom_call.1} parent=1 // pred_check_branch
      %67 = sbr.rel (0) target = $region29
    $region28: #{tpu_custom_call.1} parent=1 // pred_region
      _
    $region29: #{tpu_custom_call.1} parent=1 // pred_fallthru
      _
    // Predicated region
    $region30: #{tpu_custom_call.1} parent=1 // pred_check
      _
    $region31: #{tpu_custom_call.1} parent=1 // pred_check_branch
      %69 = sbr.rel (0) target = $region33
    $region32: #{tpu_custom_call.1} parent=1 // pred_region
      %70 = dma.done [#allocation4], 128
    $region33: #{tpu_custom_call.1} parent=1 // pred_fallthru
      _
    // Predicated region
    $region34: #{tpu_custom_call.1} parent=1 // pred_check
      _
    $region35: #{tpu_custom_call.1} parent=1 // pred_check_branch
      %72 = sbr.rel (0) target = $region37
    $region36: #{tpu_custom_call.1} parent=1 // pred_region
      %73 = dma.done [#allocation6], 256
    $region37: #{tpu_custom_call.1} parent=1 // pred_fallthru
      _
    // Predicated region
    $region38: #{tpu_custom_call.1} parent=1 // pred_check
      _
    $region39: #{tpu_custom_call.1} parent=1 // pred_check_branch
      %75 = sbr.rel (0) target = $region41
    $region40: #{tpu_custom_call.1} parent=1 // pred_region
      %76 = dma.done [#allocation6], 4096
    $region41: #{tpu_custom_call.1} parent=1 // pred_fallthru
      _
    // Predicated region
    $region42: #{tpu_custom_call.1} parent=1 // pred_check
      _
    $region43: #{tpu_custom_call.1} parent=1 // pred_check_branch
      %78 = sbr.rel (0) target = $region45
    $region44: #{tpu_custom_call.1} parent=1 // pred_region
      %79 = dma.done [#allocation9], 2048
    $region45: #{tpu_custom_call.1} parent=1 // pred_fallthru
      _
    %v81 = vld [vmem:[#allocation3] sm:$0xff]
    %v82 = vpack.c.bf16 %v81, %v81
    %v83 = vld [vmem:[#allocation5] sm:$0xff]
    %v84 = vld [vmem:[#allocation5 + $0x8] sm:$0xff]
    %v85 = vld [vmem:[%s2] sm:$0x3]
    %v87 = vlaneseq
    %v88 = vshrl.u32 %v87, 7
    %v89 = vsub.s32 0, %v88
    %v90 = vrot.slane %v85, %v89
    %v91 = vlaneseq
    %v92 = vshrl.u32 %v91, 7
    %v93 = vsub.s32 1, %v92
    %v94 = vrot.slane %v85, %v93
    %v99 = vunpack.c.l.b16 %v83
    %v100 = vunpack.c.h.b16 %v83
    %v101 = vunpack.c.l.b16 %v84
    %v102 = vunpack.c.h.b16 %v84
    %v103 = vpack.c.b16 %v101, %v99
    %v104 = vpack.c.b16 %v102, %v100
    %vm107 = vcmask 130048
    %v109 = vsel %vm107, %v82, 0
    %111 = vmatprep.subr.bf16.mxu0 %v104
    %112 = vmatpush1.bf16.msra.mxu0 %v103
    %113 = vmatprep.subr.bf16.mxu0 0
    %114 = vmatpush1.bf16.msra.mxu0 0
    %115 = vmatprep.subr.bf16.mxu0 0
    %116 = vmatpush1.bf16.msra.mxu0 0
    %117 = vmatprep.subr.bf16.mxu0 0
    %118 = vmatpush1.bf16.msra.mxu0 0
    %119 = vmatprep.subr.bf16.mxu0 0
    %120 = vmatpush1.bf16.msra.mxu0 0
    %121 = vmatprep.subr.bf16.mxu0 0
    %122 = vmatpush1.bf16.msra.mxu0 0
    %123 = vmatprep.subr.bf16.mxu0 0
    %124 = vmatpush1.bf16.msra.mxu0 0
    %125 = vmatprep.subr.bf16.mxu0 0
    %126 = vmatpush1.bf16.msra.mxu0 0
    %127 = vmatprep.subr.bf16.mxu0 0
    %128 = vmatpush1.bf16.msra.mxu0 0
    %129 = vmatprep.subr.bf16.mxu0 0
    %130 = vmatpush1.bf16.msra.mxu0 0
    %131 = vmatprep.subr.bf16.mxu0 0
    %132 = vmatpush1.bf16.msra.mxu0 0
    %133 = vmatprep.subr.bf16.mxu0 0
    %134 = vmatpush1.bf16.msra.mxu0 0
    %135 = vmatprep.subr.bf16.mxu0 0
    %136 = vmatpush1.bf16.msra.mxu0 0
    %137 = vmatprep.subr.bf16.mxu0 0
    %138 = vmatpush1.bf16.msra.mxu0 0
    %139 = vmatprep.subr.bf16.mxu0 0
    %140 = vmatpush1.bf16.msra.mxu0 0
    %141 = vmatprep.subr.bf16.mxu0 0
    %142 = vmatpush1.bf16.msra.mxu0 0
    %143 = vmatprep.mubr.bf16.mxu0 0
    %144 = vmatmul.mubr.bf16.gmra.mrb[0].mxu0 %v109
    %v145 = vpop.f32.mrb[0].mxu0
    %v146 = vadd.f32 %v90, %v145
    %v147 = vpop.f32.mrb[0].mxu0
    %v148 = vadd.f32 %v94, %v147
    %v149 = vpop.f32.mrb[0].mxu0
    %v150 = vpop.f32.mrb[0].mxu0
    %151 = vdwg.mxu0
    %v152 = vmax.f32 %v146, 0.0
    %v153 = vmax.f32 %v148, 0.0
    %v154 = vpack.c.bf16 %v152, %v152
    %v155 = vpack.c.bf16 %v153, %v153
    %v156 = vld [vmem:[#allocation7] sm:$0xff]
    %v157 = vld [vmem:[#allocation7 + $0x8] sm:$0xff]
    %v158 = vld [vmem:[#allocation7 + $0x10] sm:$0xff]
    %v159 = vld [vmem:[#allocation7 + $0x18] sm:$0xff]
    %v160 = vld [vmem:[#allocation7 + $0x20] sm:$0xff]
    %v161 = vld [vmem:[#allocation7 + $0x28] sm:$0xff]
    %v162 = vld [vmem:[#allocation7 + $0x30] sm:$0xff]
    %v163 = vld [vmem:[#allocation7 + $0x38] sm:$0xff]
    %v164 = vld [vmem:[#allocation7 + $0x40] sm:$0xff]
    %v165 = vld [vmem:[#allocation7 + $0x48] sm:$0xff]
    %v166 = vld [vmem:[#allocation7 + $0x50] sm:$0xff]
    %v167 = vld [vmem:[#allocation7 + $0x58] sm:$0xff]
    %v168 = vld [vmem:[#allocation7 + $0x60] sm:$0xff]
    %v169 = vld [vmem:[#allocation7 + $0x68] sm:$0xff]
    %v170 = vld [vmem:[#allocation7 + $0x70] sm:$0xff]
    %v171 = vld [vmem:[#allocation7 + $0x78] sm:$0xff]
    %v172 = vld [vmem:[#allocation7 + $0x80] sm:$0xff]
    %v173 = vld [vmem:[#allocation7 + $0x88] sm:$0xff]
    %v174 = vld [vmem:[#allocation7 + $0x90] sm:$0xff]
    %v175 = vld [vmem:[#allocation7 + $0x98] sm:$0xff]
    %v176 = vld [vmem:[#allocation7 + $0xa0] sm:$0xff]
    %v177 = vld [vmem:[#allocation7 + $0xa8] sm:$0xff]
    %v178 = vld [vmem:[#allocation7 + $0xb0] sm:$0xff]
    %v179 = vld [vmem:[#allocation7 + $0xb8] sm:$0xff]
    %v180 = vld [vmem:[#allocation7 + $0xc0] sm:$0xff]
    %v181 = vld [vmem:[#allocation7 + $0xc8] sm:$0xff]
    %v182 = vld [vmem:[#allocation7 + $0xd0] sm:$0xff]
    %v183 = vld [vmem:[#allocation7 + $0xd8] sm:$0xff]
    %v184 = vld [vmem:[#allocation7 + $0xe0] sm:$0xff]
    %v185 = vld [vmem:[#allocation7 + $0xe8] sm:$0xff]
    %v186 = vld [vmem:[#allocation7 + $0xf0] sm:$0xff]
    %v187 = vld [vmem:[#allocation7 + $0xf8] sm:$0xff]
    %v188 = vld [vmem:[%s4] sm:$0x3]
    %v190 = vlaneseq
    %v191 = vshrl.u32 %v190, 7
    %v192 = vsub.s32 0, %v191
    %v193 = vrot.slane %v188, %v192
    %v194 = vlaneseq
    %v195 = vshrl.u32 %v194, 7
    %v196 = vsub.s32 1, %v195
    %v197 = vrot.slane %v188, %v196
    %v232 = vunpack.c.l.b16 %v156
    %v233 = vunpack.c.h.b16 %v156
    %v234 = vunpack.c.l.b16 %v157
    %v235 = vunpack.c.h.b16 %v157
    %v236 = vunpack.c.l.b16 %v158
    %v237 = vunpack.c.h.b16 %v158
    %v238 = vunpack.c.l.b16 %v159
    %v239 = vunpack.c.h.b16 %v159
    %v240 = vunpack.c.l.b16 %v160
    %v241 = vunpack.c.h.b16 %v160
    %v242 = vunpack.c.l.b16 %v161
    %v243 = vunpack.c.h.b16 %v161
    %v244 = vunpack.c.l.b16 %v162
    %v245 = vunpack.c.h.b16 %v162
    %v246 = vunpack.c.l.b16 %v163
    %v247 = vunpack.c.h.b16 %v163
    %v248 = vunpack.c.l.b16 %v164
    %v249 = vunpack.c.h.b16 %v164
    %v250 = vunpack.c.l.b16 %v165
    %v251 = vunpack.c.h.b16 %v165
    %v252 = vunpack.c.l.b16 %v166
    %v253 = vunpack.c.h.b16 %v166
    %v254 = vunpack.c.l.b16 %v167
    %v255 = vunpack.c.h.b16 %v167
    %v256 = vunpack.c.l.b16 %v168
    %v257 = vunpack.c.h.b16 %v168
    %v258 = vunpack.c.l.b16 %v169
    %v259 = vunpack.c.h.b16 %v169
    %v260 = vunpack.c.l.b16 %v170
    %v261 = vunpack.c.h.b16 %v170
    %v262 = vunpack.c.l.b16 %v171
    %v263 = vunpack.c.h.b16 %v171
    %v264 = vunpack.c.l.b16 %v172
    %v265 = vunpack.c.h.b16 %v172
    %v266 = vunpack.c.l.b16 %v173
    %v267 = vunpack.c.h.b16 %v173
    %v268 = vunpack.c.l.b16 %v174
    %v269 = vunpack.c.h.b16 %v174
    %v270 = vunpack.c.l.b16 %v175
    %v271 = vunpack.c.h.b16 %v175
    %v272 = vunpack.c.l.b16 %v176
    %v273 = vunpack.c.h.b16 %v176
    %v274 = vunpack.c.l.b16 %v177
    %v275 = vunpack.c.h.b16 %v177
    %v276 = vunpack.c.l.b16 %v178
    %v277 = vunpack.c.h.b16 %v178
    %v278 = vunpack.c.l.b16 %v179
    %v279 = vunpack.c.h.b16 %v179
    %v280 = vunpack.c.l.b16 %v180
    %v281 = vunpack.c.h.b16 %v180
    %v282 = vunpack.c.l.b16 %v181
    %v283 = vunpack.c.h.b16 %v181
    %v284 = vunpack.c.l.b16 %v182
    %v285 = vunpack.c.h.b16 %v182
    %v286 = vunpack.c.l.b16 %v183
    %v287 = vunpack.c.h.b16 %v183
    %v288 = vunpack.c.l.b16 %v184
    %v289 = vunpack.c.h.b16 %v184
    %v290 = vunpack.c.l.b16 %v185
    %v291 = vunpack.c.h.b16 %v185
    %v292 = vunpack.c.l.b16 %v186
    %v293 = vunpack.c.h.b16 %v186
    %v294 = vunpack.c.l.b16 %v187
    %v295 = vunpack.c.h.b16 %v187
    %v296 = vpack.c.b16 %v234, %v232
    %v297 = vpack.c.b16 %v235, %v233
    %v298 = vpack.c.b16 %v238, %v236
    %v299 = vpack.c.b16 %v239, %v237
    %v300 = vpack.c.b16 %v242, %v240
    %v301 = vpack.c.b16 %v243, %v241
    %v302 = vpack.c.b16 %v246, %v244
    %v303 = vpack.c.b16 %v247, %v245
    %v304 = vpack.c.b16 %v250, %v248
    %v305 = vpack.c.b16 %v251, %v249
    %v306 = vpack.c.b16 %v254, %v252
    %v307 = vpack.c.b16 %v255, %v253
    %v308 = vpack.c.b16 %v258, %v256
    %v309 = vpack.c.b16 %v259, %v257
    %v310 = vpack.c.b16 %v262, %v260
    %v311 = vpack.c.b16 %v263, %v261
    %v312 = vpack.c.b16 %v266, %v264
    %v313 = vpack.c.b16 %v267, %v265
    %v314 = vpack.c.b16 %v270, %v268
    %v315 = vpack.c.b16 %v271, %v269
    %v316 = vpack.c.b16 %v274, %v272
    %v317 = vpack.c.b16 %v275, %v273
    %v318 = vpack.c.b16 %v278, %v276
    %v319 = vpack.c.b16 %v279, %v277
    %v320 = vpack.c.b16 %v282, %v280
    %v321 = vpack.c.b16 %v283, %v281
    %v322 = vpack.c.b16 %v286, %v284
    %v323 = vpack.c.b16 %v287, %v285
    %v324 = vpack.c.b16 %v290, %v288
    %v325 = vpack.c.b16 %v291, %v289
    %v326 = vpack.c.b16 %v294, %v292
    %v327 = vpack.c.b16 %v295, %v293
    %360 = vmatprep.subr.bf16.mxu0 %v297
    %361 = vmatpush1.bf16.msra.mxu0 %v296
    %362 = vmatprep.subr.bf16.mxu0 %v299
    %363 = vmatpush1.bf16.msra.mxu0 %v298
    %364 = vmatprep.subr.bf16.mxu0 %v301
    %365 = vmatpush1.bf16.msra.mxu0 %v300
    %366 = vmatprep.subr.bf16.mxu0 %v303
    %367 = vmatpush1.bf16.msra.mxu0 %v302
    %368 = vmatprep.subr.bf16.mxu0 %v305
    %369 = vmatpush1.bf16.msra.mxu0 %v304
    %370 = vmatprep.subr.bf16.mxu0 %v307
    %371 = vmatpush1.bf16.msra.mxu0 %v306
    %372 = vmatprep.subr.bf16.mxu0 %v309
    %373 = vmatpush1.bf16.msra.mxu0 %v308
    %374 = vmatprep.subr.bf16.mxu0 %v311
    %375 = vmatpush1.bf16.msra.mxu0 %v310
    %376 = vmatprep.subr.bf16.mxu0 %v313
    %377 = vmatpush1.bf16.msra.mxu0 %v312
    %378 = vmatprep.subr.bf16.mxu0 %v315
    %379 = vmatpush1.bf16.msra.mxu0 %v314
    %380 = vmatprep.subr.bf16.mxu0 %v317
    %381 = vmatpush1.bf16.msra.mxu0 %v316
    %382 = vmatprep.subr.bf16.mxu0 %v319
    %383 = vmatpush1.bf16.msra.mxu0 %v318
    %384 = vmatprep.subr.bf16.mxu0 %v321
    %385 = vmatpush1.bf16.msra.mxu0 %v320
    %386 = vmatprep.subr.bf16.mxu0 %v323
    %387 = vmatpush1.bf16.msra.mxu0 %v322
    %388 = vmatprep.subr.bf16.mxu0 %v325
    %389 = vmatpush1.bf16.msra.mxu0 %v324
    %390 = vmatprep.subr.bf16.mxu0 %v327
    %391 = vmatpush1.bf16.msra.mxu0 %v326
    %392 = vmatprep.mubr.bf16.mxu0 %v155
    %393 = vmatmul.mubr.bf16.gmra.mrb[0].mxu0 %v154
    %v394 = vpop.f32.mrb[0].mxu0
    %v395 = vadd.f32 %v193, %v394
    %v396 = vpop.f32.mrb[0].mxu0
    %v397 = vadd.f32 %v197, %v396
    %v398 = vpop.f32.mrb[0].mxu0
    %v399 = vpop.f32.mrb[0].mxu0
    %400 = vdwg.mxu0
    %v401 = vmax.f32 %v395, 0.0
    %v402 = vmax.f32 %v397, 0.0
    %v403 = vpack.c.bf16 %v401, %v401
    %v404 = vpack.c.bf16 %v402, %v402
    %v405 = vld [vmem:[#allocation8] sm:$0xf]
    %v406 = vld [vmem:[#allocation8 + $0x4] sm:$0xf]
    %v407 = vld [vmem:[#allocation8 + $0x8] sm:$0xf]
    %v408 = vld [vmem:[#allocation8 + $0xc] sm:$0xf]
    %v409 = vld [vmem:[#allocation8 + $0x10] sm:$0xf]
    %v410 = vld [vmem:[#allocation8 + $0x14] sm:$0xf]
    %v411 = vld [vmem:[#allocation8 + $0x18] sm:$0xf]
    %v412 = vld [vmem:[#allocation8 + $0x1c] sm:$0xf]
    %v413 = vld [vmem:[#allocation8 + $0x20] sm:$0xf]
    %v414 = vld [vmem:[#allocation8 + $0x24] sm:$0xf]
    %v415 = vld [vmem:[#allocation8 + $0x28] sm:$0xf]
    %v416 = vld [vmem:[#allocation8 + $0x2c] sm:$0xf]
    %v417 = vld [vmem:[#allocation8 + $0x30] sm:$0xf]
    %v418 = vld [vmem:[#allocation8 + $0x34] sm:$0xf]
    %v419 = vld [vmem:[#allocation8 + $0x38] sm:$0xf]
    %v420 = vld [vmem:[#allocation8 + $0x3c] sm:$0xf]
    %v421 = vld [vmem:[#allocation8 + $0x40] sm:$0xf]
    %v422 = vld [vmem:[#allocation8 + $0x44] sm:$0xf]
    %v423 = vld [vmem:[#allocation8 + $0x48] sm:$0xf]
    %v424 = vld [vmem:[#allocation8 + $0x4c] sm:$0xf]
    %v425 = vld [vmem:[#allocation8 + $0x50] sm:$0xf]
    %v426 = vld [vmem:[#allocation8 + $0x54] sm:$0xf]
    %v427 = vld [vmem:[#allocation8 + $0x58] sm:$0xf]
    %v428 = vld [vmem:[#allocation8 + $0x5c] sm:$0xf]
    %v429 = vld [vmem:[#allocation8 + $0x60] sm:$0xf]
    %v430 = vld [vmem:[#allocation8 + $0x64] sm:$0xf]
    %v431 = vld [vmem:[#allocation8 + $0x68] sm:$0xf]
    %v432 = vld [vmem:[#allocation8 + $0x6c] sm:$0xf]
    %v433 = vld [vmem:[#allocation8 + $0x70] sm:$0xf]
    %v434 = vld [vmem:[#allocation8 + $0x74] sm:$0xf]
    %v435 = vld [vmem:[#allocation8 + $0x78] sm:$0xf]
    %v436 = vld [vmem:[#allocation8 + $0x7c] sm:$0xf]
    %v469 = vunpack.c.l.b16 %v405
    %v470 = vunpack.c.l.b16 %v406
    %v471 = vunpack.c.l.b16 %v407
    %v472 = vunpack.c.l.b16 %v408
    %v473 = vunpack.c.l.b16 %v409
    %v474 = vunpack.c.l.b16 %v410
    %v475 = vunpack.c.l.b16 %v411
    %v476 = vunpack.c.l.b16 %v412
    %v477 = vunpack.c.l.b16 %v413
    %v478 = vunpack.c.l.b16 %v414
    %v479 = vunpack.c.l.b16 %v415
    %v480 = vunpack.c.l.b16 %v416
    %v481 = vunpack.c.l.b16 %v417
    %v482 = vunpack.c.l.b16 %v418
    %v483 = vunpack.c.l.b16 %v419
    %v484 = vunpack.c.l.b16 %v420
    %v485 = vunpack.c.l.b16 %v421
    %v486 = vunpack.c.l.b16 %v422
    %v487 = vunpack.c.l.b16 %v423
    %v488 = vunpack.c.l.b16 %v424
    %v489 = vunpack.c.l.b16 %v425
    %v490 = vunpack.c.l.b16 %v426
    %v491 = vunpack.c.l.b16 %v427
    %v492 = vunpack.c.l.b16 %v428
    %v493 = vunpack.c.l.b16 %v429
    %v494 = vunpack.c.l.b16 %v430
    %v495 = vunpack.c.l.b16 %v431
    %v496 = vunpack.c.l.b16 %v432
    %v497 = vunpack.c.l.b16 %v433
    %v498 = vunpack.c.l.b16 %v434
    %v499 = vunpack.c.l.b16 %v435
    %v500 = vunpack.c.l.b16 %v436
    %v501 = vpack.c.b16 %v470, %v469
    %v502 = vpack.c.b16 %v472, %v471
    %v503 = vpack.c.b16 %v474, %v473
    %v504 = vpack.c.b16 %v476, %v475
    %v505 = vpack.c.b16 %v478, %v477
    %v506 = vpack.c.b16 %v480, %v479
    %v507 = vpack.c.b16 %v482, %v481
    %v508 = vpack.c.b16 %v484, %v483
    %v509 = vpack.c.b16 %v486, %v485
    %v510 = vpack.c.b16 %v488, %v487
    %v511 = vpack.c.b16 %v490, %v489
    %v512 = vpack.c.b16 %v492, %v491
    %v513 = vpack.c.b16 %v494, %v493
    %v514 = vpack.c.b16 %v496, %v495
    %v515 = vpack.c.b16 %v498, %v497
    %v516 = vpack.c.b16 %v500, %v499
    %533 = vmatprep.subr.bf16.mxu0 0
    %534 = vmatpush1.bf16.msra.mxu0 %v501
    %535 = vmatprep.subr.bf16.mxu0 0
    %536 = vmatpush1.bf16.msra.mxu0 %v502
    %537 = vmatprep.subr.bf16.mxu0 0
    %538 = vmatpush1.bf16.msra.mxu0 %v503
    %539 = vmatprep.subr.bf16.mxu0 0
    %540 = vmatpush1.bf16.msra.mxu0 %v504
    %541 = vmatprep.subr.bf16.mxu0 0
    %542 = vmatpush1.bf16.msra.mxu0 %v505
    %543 = vmatprep.subr.bf16.mxu0 0
    %544 = vmatpush1.bf16.msra.mxu0 %v506
    %545 = vmatprep.subr.bf16.mxu0 0
    %546 = vmatpush1.bf16.msra.mxu0 %v507
    %547 = vmatprep.subr.bf16.mxu0 0
    %548 = vmatpush1.bf16.msra.mxu0 %v508
    %549 = vmatprep.subr.bf16.mxu0 0
    %550 = vmatpush1.bf16.msra.mxu0 %v509
    %551 = vmatprep.subr.bf16.mxu0 0
    %552 = vmatpush1.bf16.msra.mxu0 %v510
    %553 = vmatprep.subr.bf16.mxu0 0
    %554 = vmatpush1.bf16.msra.mxu0 %v511
    %555 = vmatprep.subr.bf16.mxu0 0
    %556 = vmatpush1.bf16.msra.mxu0 %v512
    %557 = vmatprep.subr.bf16.mxu0 0
    %558 = vmatpush1.bf16.msra.mxu0 %v513
    %559 = vmatprep.subr.bf16.mxu0 0
    %560 = vmatpush1.bf16.msra.mxu0 %v514
    %561 = vmatprep.subr.bf16.mxu0 0
    %562 = vmatpush1.bf16.msra.mxu0 %v515
    %563 = vmatprep.subr.bf16.mxu0 0
    %564 = vmatpush1.bf16.msra.mxu0 %v516
    %565 = vmatprep.mubr.bf16.mxu0 %v404
    %566 = vmatmul.mubr.bf16.gmra.mrb[0].mxu0 %v403
    %v567 = vpop.f32.mrb[0].mxu0
    %v568 = vadd.f32 0.0, %v567
    %v569 = vpop.f32.mrb[0].mxu0
    %v570 = vpop.f32.mrb[0].mxu0
    %v571 = vpop.f32.mrb[0].mxu0
    %572 = vdwg.mxu0
    %s573 = sld [smem:[#allocation2]]
    %v574 = vstv %s573
    %v575 = vadd.f32 %v568, %v574
    %vm576 = vcmask 7168
    %577 = vst.msk [vmem:[%s7] sm:$0xff] %vm576, %v575
    // Predicated region
    $region46: #{tpu_custom_call.1} parent=1 // pred_check
      _
    $region47: #{tpu_custom_call.1} parent=1 // pred_check_branch
      %579 = sbr.rel (0) target = $region49
    $region48: #{tpu_custom_call.1} parent=1 // pred_region
      _
    $region49: #{tpu_custom_call.1} parent=1 // pred_fallthru
      _
    // Predicated region
    $region50: #{tpu_custom_call.1} parent=1 // pred_check
      _
    $region51: #{tpu_custom_call.1} parent=1 // pred_check_branch
      %581 = sbr.rel (0) target = $region53
    $region52: #{tpu_custom_call.1} parent=1 // pred_region
      _
    $region53: #{tpu_custom_call.1} parent=1 // pred_fallthru
      _
    %582 = vsyncpa [#allocation4], 1
    %583 = vsyncpa [#allocation6], 1
    %584 = vsyncpa [#allocation9], 1

</llo_original>
